<compile_context>
chip_gen: v5e
topology: v5e:2x2
jax: 0.10.0
libtpu: 0.0.40
codegen_flags: <defaults>
</compile_context>

<pallas_src>
import jax
import jax.numpy as jnp
from jax import lax
from jax.experimental import pallas as pl
from jax.experimental.pallas import tpu as pltpu


def _round_up(x, m):
    return (x + m - 1) // m * m


def gru_classifier_kernel(lens_smem, gx_ref, lens_ref, whh_ref, bhn_ref,
                          wfc_ref, bfc_ref, out_ref, h_ref):
    """One (batch-tile, time-chunk) grid step of the GRU recurrence.

    lens_smem: (Bp,)        int32 sequence lengths (SMEM, scalar-prefetched)
    gx_ref   : (TC, BT, 3Hp) bf16  precomputed input-gate activations
    lens_ref : (BT, 1)      int32 lengths for this batch tile (VMEM)
    whh_ref  : (Hp, 3Hp)    bf16  W_hh^T, gates [r,z,n] lane-aligned at g*Hp
    bhn_ref  : (1, Hp)      f32   b_hn (kept inside the r*(...) term)
    wfc_ref  : (Hp, Op)     bf16  fc weight^T
    bfc_ref  : (1, Op)      f32
    out_ref  : (BT, Op)     f32   (resident across the time axis)
    h_ref    : (BT, Hp)     f32   recurrent hidden state (VMEM scratch)
    """
    b = pl.program_id(0)            # batch tile ("parallel")
    c = pl.program_id(1)            # time chunk ("arbitrary", sequential)
    nc = pl.num_programs(1)

    TC = gx_ref.shape[0]
    BT, Hp = h_ref.shape

    @pl.when(c == 0)
    def _():
        h_ref[...] = jnp.zeros_like(h_ref)

    # Lengths are sorted descending, so row b*BT carries this tile's maximum;
    # skip fully padded timesteps of this chunk.
    tile_max = lens_smem[b * BT]
    steps = jnp.clip(tile_max - c * TC, 0, TC)

    lens = lens_ref[...]            # (BT, 1) int32, hoisted out of the loop
    b_hn = bhn_ref[...]             # (1, Hp) f32, hoisted out of the loop

    def step(t, carry):
        h = h_ref[...]                                       # (BT, Hp) f32
        g_x = gx_ref[t].astype(jnp.float32)                  # (BT, 3Hp)
        g_h = jnp.dot(h.astype(jnp.bfloat16), whh_ref[...],
                      preferred_element_type=jnp.float32)    # (BT, 3Hp) f32

        r = jax.nn.sigmoid(g_x[:, 0:Hp] + g_h[:, 0:Hp])
        z = jax.nn.sigmoid(g_x[:, Hp:2 * Hp] + g_h[:, Hp:2 * Hp])
        n = jnp.tanh(g_x[:, 2 * Hp:3 * Hp] +
                     r * (g_h[:, 2 * Hp:3 * Hp] + b_hn))
        h_new = (1.0 - z) * n + z * h

        # pack_padded_sequence semantics: freeze h once t >= length[row].
        valid = (c * TC + t) < lens                          # (BT, 1) bool
        h_ref[...] = jnp.where(valid, h_new, h)
        return carry

    lax.fori_loop(0, steps, step, 0)

    @pl.when(c == nc - 1)
    def _():
        out_ref[...] = (jnp.dot(h_ref[...].astype(jnp.bfloat16), wfc_ref[...],
                                preferred_element_type=jnp.float32)
                        + bfc_ref[...])


def gru_classifier_forward(tokens, seq_lengths, params, *,
                           time_chunk=128, batch_tile=128):
    """tokens: (B, T) int32; seq_lengths: (B,) int32, sorted descending."""
    emb = params["embedding"].astype(jnp.float32)    # (V, H), row 0 zeros
    w_ih = params["w_ih"].astype(jnp.float32)        # (3H, H), gates [r,z,n]
    w_hh = params["w_hh"].astype(jnp.float32)        # (3H, H)
    b_ih = params["b_ih"].astype(jnp.float32)        # (3H,)
    b_hh = params["b_hh"].astype(jnp.float32)        # (3H,)
    w_fc = params["w_fc"].astype(jnp.float32)        # (O, H)
    b_fc = params["b_fc"].astype(jnp.float32)        # (O,)

    B, T = tokens.shape
    V, H = emb.shape
    O = w_fc.shape[0]

    Hp = _round_up(H, 128)                 # lane-align hidden & each gate blk
    Op = _round_up(max(O, 128), 128)       # lane-dense output
    Bp = _round_up(B, 16)                  # bf16 sublane granularity
    BT = min(Bp, batch_tile)
    Bp = _round_up(Bp, BT)
    TC = min(time_chunk, T)
    Tp = _round_up(T, TC)

    # --- Hoisted input projection: per-token gate table (vocab, 3Hp). ---
    # gx(v) = emb(v) @ W_ih^T + b_ih, with b_hr / b_hz folded in (they add
    # linearly); b_hn kept separate (it is multiplied by r in the n gate).
    gates = emb @ w_ih.T + b_ih                                  # (V, 3H)
    gates = gates.at[:, 0:H].add(b_hh[0:H])
    gates = gates.at[:, H:2 * H].add(b_hh[H:2 * H])
    table = jnp.zeros((V, 3 * Hp), jnp.float32)
    for g in range(3):
        table = table.at[:, g * Hp:g * Hp + H].set(gates[:, g * H:(g + 1) * H])

    # Per-token gathered gate activations, time-major, streamed in chunks.
    # TODO(synk): for very large T*B, move this gather inside the kernel
    # (pass token ids + the (V, 3Hp) table) to avoid the (T, B, 3Hp) HBM slab.
    gx = jnp.take(table, tokens.T.astype(jnp.int32), axis=0)    # (T, B, 3Hp)
    gx = gx.astype(jnp.bfloat16)
    gx = jnp.pad(gx, ((0, Tp - T), (0, Bp - B), (0, 0)))

    # Padded, lane-aligned recurrent / fc weights as bf16 MXU operands.
    whh = jnp.zeros((Hp, 3 * Hp), jnp.float32)
    for g in range(3):
        whh = whh.at[:H, g * Hp:g * Hp + H].set(w_hh[g * H:(g + 1) * H, :].T)
    whh = whh.astype(jnp.bfloat16)
    bhn = jnp.zeros((1, Hp), jnp.float32).at[0, :H].set(b_hh[2 * H:3 * H])

    wfc = jnp.zeros((Hp, Op), jnp.float32).at[:H, :O].set(w_fc.T)
    wfc = wfc.astype(jnp.bfloat16)
    bfc = jnp.zeros((1, Op), jnp.float32).at[0, :O].set(b_fc)

    lens_p = jnp.pad(seq_lengths.astype(jnp.int32), (0, Bp - B))  # pads -> 0
    lens_col = lens_p.reshape(Bp, 1)

    grid = (Bp // BT, Tp // TC)

    out = pl.pallas_call(
        gru_classifier_kernel,
        out_shape=jax.ShapeDtypeStruct((Bp, Op), jnp.float32),
        grid_spec=pltpu.PrefetchScalarGridSpec(
            num_scalar_prefetch=1,
            grid=grid,
            in_specs=[
                pl.BlockSpec((TC, BT, 3 * Hp), lambda b, c, sl: (c, b, 0)),
                pl.BlockSpec((BT, 1), lambda b, c, sl: (b, 0)),
                pl.BlockSpec((Hp, 3 * Hp), lambda b, c, sl: (0, 0)),
                pl.BlockSpec((1, Hp), lambda b, c, sl: (0, 0)),
                pl.BlockSpec((Hp, Op), lambda b, c, sl: (0, 0)),
                pl.BlockSpec((1, Op), lambda b, c, sl: (0, 0)),
            ],
            out_specs=pl.BlockSpec((BT, Op), lambda b, c, sl: (b, 0)),
            scratch_shapes=[pltpu.VMEM((BT, Hp), jnp.float32)],
        ),
        compiler_params=pltpu.CompilerParams(
            dimension_semantics=("parallel", "arbitrary"),
            vmem_limit_bytes=48 * 1024 * 1024,
        ),
    )(lens_p, gx, lens_col, whh, bhn, wfc, bfc)

    return out[:B, :O]


def gru_classifier_reference(tokens, seq_lengths, params):
    """Pure-JAX f32 reference with identical semantics (for sanity check)."""
    emb, w_ih, w_hh = params["embedding"], params["w_ih"], params["w_hh"]
    b_ih, b_hh, w_fc, b_fc = (params["b_ih"], params["b_hh"],
                              params["w_fc"], params["b_fc"])
    B, T = tokens.shape
    H = emb.shape[1]
    x = jnp.take(emb, tokens.T, axis=0).astype(jnp.float32)   # (T, B, H)
    h = jnp.zeros((B, H), jnp.float32)
    for t in range(T):
        gx = x[t] @ w_ih.T + b_ih
        gh = h @ w_hh.T + b_hh
        r = jax.nn.sigmoid(gx[:, :H] + gh[:, :H])
        z = jax.nn.sigmoid(gx[:, H:2 * H] + gh[:, H:2 * H])
        n = jnp.tanh(gx[:, 2 * H:] + r * gh[:, 2 * H:])
        h_new = (1.0 - z) * n + z * h
        h = jnp.where((t < seq_lengths)[:, None], h_new, h)
    return h @ w_fc.T + b_fc


def init_params(key, vocab_size, hidden_size, output_size):
    """Deterministic init mimicking PyTorch's uniform(-1/sqrt(H), 1/sqrt(H))."""
    ks = jax.random.split(key, 8)
    bound = 1.0 / jnp.sqrt(jnp.float32(hidden_size))

    def u(k, shape):
        return jax.random.uniform(k, shape, jnp.float32, -bound, bound)

    emb = jax.random.normal(ks[0], (vocab_size, hidden_size), jnp.float32)
    emb = emb.at[0].set(0.0)                 # padding_idx=0

    return {
        "embedding": emb,
        "w_ih": u(ks[1], (3 * hidden_size, hidden_size)),
        "w_hh": u(ks[2], (3 * hidden_size, hidden_size)),
        "b_ih": u(ks[3], (3 * hidden_size,)),
        "b_hh": u(ks[4], (3 * hidden_size,)),
        "w_fc": u(ks[5], (output_size, hidden_size)),
        "b_fc": u(ks[6], (output_size,)),
    }


if __name__ == "__main__":
    vocab_size, hidden_size, output_size = 16, 32, 4
    batch, seq_len = 2, 8

    key = jax.random.PRNGKey(0)
    pkey, tkey = jax.random.split(key)
    params = init_params(pkey, vocab_size, hidden_size, output_size)

    # Sequence lengths sorted descending (pack_padded_sequence convention).
    seq_lengths = jnp.array([8, 5], dtype=jnp.int32)

    # Token ids in [1, vocab), zero-padded past each sequence's length.
    tokens = jax.random.randint(tkey, (batch, seq_len), 1, vocab_size,
                                dtype=jnp.int32)
    pos = jnp.arange(seq_len)[None, :]
    tokens = jnp.where(pos < seq_lengths[:, None], tokens, 0)

    fwd = jax.jit(gru_classifier_forward)
    out = fwd(tokens, seq_lengths, params)
    jax.block_until_ready(out)

    assert out.shape == (batch, output_size)

    ref = gru_classifier_reference(tokens, seq_lengths, params)
    max_err = float(jnp.max(jnp.abs(out - ref)))
    assert max_err < 1e-1, f"max abs error vs reference: {max_err}"

    print("KERNEL_OK")
</pallas_src>

<mosaic_0001>
module attributes {stable_mosaic.version = 11 : i64} {
  func.func @gru_classifier_kernel(%arg0: i32, %arg1: i32, %arg2: memref<16xi32, #tpu.memory_space<smem>>, %arg3: memref<8x16x384xbf16, #tpu.memory_space<vmem>>, %arg4: memref<16x1xi32, #tpu.memory_space<vmem>>, %arg5: memref<128x384xbf16, #tpu.memory_space<vmem>>, %arg6: memref<1x128xf32, #tpu.memory_space<vmem>>, %arg7: memref<128x128xbf16, #tpu.memory_space<vmem>>, %arg8: memref<1x128xf32, #tpu.memory_space<vmem>>, %arg9: memref<16x128xf32, #tpu.memory_space<vmem>>, %arg10: memref<16x128xf32, #tpu.memory_space<vmem>>) attributes {dimension_semantics = [#tpu.dimension_semantics<parallel>, #tpu.dimension_semantics<arbitrary>], iteration_bounds = array<i64: 1, 1>, scalar_prefetch = 1 : i64, scratch_operands = 1 : i64, tpu.core_type = #tpu.core_type<tc>, window_params = [{transform_indices = @transform_0, window_bounds = array<i64: 8, 16, 384>}, {transform_indices = @transform_1, window_bounds = array<i64: 16, 1>}, {pipeline_mode = #tpu.pipeline_mode<synchronous>, transform_indices = @transform_2, window_bounds = array<i64: 128, 384>}, {pipeline_mode = #tpu.pipeline_mode<synchronous>, transform_indices = @transform_3, window_bounds = array<i64: 1, 128>}, {pipeline_mode = #tpu.pipeline_mode<synchronous>, transform_indices = @transform_4, window_bounds = array<i64: 128, 128>}, {pipeline_mode = #tpu.pipeline_mode<synchronous>, transform_indices = @transform_5, window_bounds = array<i64: 1, 128>}, {transform_indices = @transform_6, window_bounds = array<i64: 16, 128>}]} {
    %c0_i32 = arith.constant 0 : i32
    %0 = arith.cmpi eq, %arg1, %c0_i32 : i32
    %1 = arith.extui %0 : i1 to i32
    %c0_i32_0 = arith.constant 0 : i32
    %2 = arith.cmpi ne, %1, %c0_i32_0 : i32
    scf.if %2 {
      %cst = arith.constant 0.000000e+00 : f32
      %17 = vector.broadcast %cst : f32 to vector<16x128xf32>
      %c0_10 = arith.constant 0 : index
      %c0_11 = arith.constant 0 : index
      %18 = vector.load %arg10[%c0_10, %c0_11] : memref<16x128xf32, #tpu.memory_space<vmem>>, vector<16x128xf32>
      tpu.vector_store %arg10[%c0_10, %c0_11], %17 {strides = array<i32>} : memref<16x128xf32, #tpu.memory_space<vmem>>, vector<16x128xf32>,
    } else {
    }
    %c16_i32 = arith.constant 16 : i32
    %3 = arith.muli %arg0, %c16_i32 : i32
    %4 = arith.index_cast %3 : i32 to index
    %5 = memref.load %arg2[%4] : memref<16xi32, #tpu.memory_space<smem>>
    %c8_i32 = arith.constant 8 : i32
    %6 = arith.muli %arg1, %c8_i32 : i32
    %7 = arith.subi %5, %6 : i32
    %c0_i32_1 = arith.constant 0 : i32
    %c8_i32_2 = arith.constant 8 : i32
    %8 = arith.maxsi %c0_i32_1, %7 : i32
    %9 = arith.minsi %c8_i32_2, %8 : i32
    %c0 = arith.constant 0 : index
    %c0_3 = arith.constant 0 : index
    %10 = vector.load %arg4[%c0, %c0_3] : memref<16x1xi32, #tpu.memory_space<vmem>>, vector<16x1xi32>
    %c0_4 = arith.constant 0 : index
    %c0_5 = arith.constant 0 : index
    %11 = vector.load %arg6[%c0_4, %c0_5] : memref<1x128xf32, #tpu.memory_space<vmem>>, vector<1x128xf32>
    %c0_i32_6 = arith.constant 0 : i32
    %c0_i32_7 = arith.constant 0 : i32
    %12 = arith.subi %9, %c0_i32_7 : i32
    %13 = arith.addi %c0_i32_7, %12 : i32
    %c1_i32 = arith.constant 1 : i32
    scf.for %arg11 = %c0_i32_7 to %13 step %c1_i32  : i32 {
      %c0_10 = arith.constant 0 : index
      %c0_11 = arith.constant 0 : index
      %17 = vector.load %arg10[%c0_10, %c0_11] : memref<16x128xf32, #tpu.memory_space<vmem>>, vector<16x128xf32>
      %18 = arith.index_cast %arg11 : i32 to index
      %c0_12 = arith.constant 0 : index
      %c0_13 = arith.constant 0 : index
      %19 = vector.load %arg3[%18, %c0_12, %c0_13] : memref<8x16x384xbf16, #tpu.memory_space<vmem>>, vector<1x16x384xbf16>
      %20 = vector.shape_cast %19 : vector<1x16x384xbf16> to vector<16x384xbf16>
      %21 = arith.extf %20 : vector<16x384xbf16> to vector<16x384xf32>
      %22 = arith.truncf %17 : vector<16x128xf32> to vector<16x128xbf16>
      %c0_14 = arith.constant 0 : index
      %c0_15 = arith.constant 0 : index
      %23 = vector.load %arg5[%c0_14, %c0_15] : memref<128x384xbf16, #tpu.memory_space<vmem>>, vector<128x384xbf16>
      %cst = arith.constant dense<0.000000e+00> : vector<16x384xf32>
      %24 = tpu.matmul %22, %23, %cst {dimension_numbers = #tpu.dot_dimension_numbers<[1], [0], [0], [1], [0, 0, 1, 1], [], []>} : vector<16x128xbf16>, vector<128x384xbf16>, vector<16x384xf32> -> vector<16x384xf32>
      %25 = vector.extract_strided_slice %21 {offsets = [0, 0], sizes = [16, 128], strides = [1, 1]} : vector<16x384xf32> to vector<16x128xf32>
      %26 = vector.extract_strided_slice %24 {offsets = [0, 0], sizes = [16, 128], strides = [1, 1]} : vector<16x384xf32> to vector<16x128xf32>
      %27 = arith.addf %25, %26 : vector<16x128xf32>
      %28 = arith.negf %27 : vector<16x128xf32>
      %29 = math.exp %28 : vector<16x128xf32>
      %cst_16 = arith.constant 1.000000e+00 : f32
      %30 = vector.broadcast %cst_16 : f32 to vector<16x128xf32>
      %31 = arith.addf %30, %29 : vector<16x128xf32>
      %32 = arith.divf %30, %31 : vector<16x128xf32>
      %33 = vector.extract_strided_slice %21 {offsets = [0, 128], sizes = [16, 128], strides = [1, 1]} : vector<16x384xf32> to vector<16x128xf32>
      %34 = vector.extract_strided_slice %24 {offsets = [0, 128], sizes = [16, 128], strides = [1, 1]} : vector<16x384xf32> to vector<16x128xf32>
      %35 = arith.addf %33, %34 : vector<16x128xf32>
      %36 = arith.negf %35 : vector<16x128xf32>
      %37 = math.exp %36 : vector<16x128xf32>
      %cst_17 = arith.constant 1.000000e+00 : f32
      %38 = vector.broadcast %cst_17 : f32 to vector<16x128xf32>
      %39 = arith.addf %38, %37 : vector<16x128xf32>
      %40 = arith.divf %38, %39 : vector<16x128xf32>
      %41 = vector.extract_strided_slice %21 {offsets = [0, 256], sizes = [16, 128], strides = [1, 1]} : vector<16x384xf32> to vector<16x128xf32>
      %42 = vector.extract_strided_slice %24 {offsets = [0, 256], sizes = [16, 128], strides = [1, 1]} : vector<16x384xf32> to vector<16x128xf32>
      %43 = vector.broadcast %11 : vector<1x128xf32> to vector<16x128xf32>
      %44 = arith.addf %42, %43 : vector<16x128xf32>
      %45 = arith.mulf %32, %44 : vector<16x128xf32>
      %46 = arith.addf %41, %45 : vector<16x128xf32>
      %47 = math.tanh %46 : vector<16x128xf32>
      %cst_18 = arith.constant 1.000000e+00 : f32
      %48 = vector.broadcast %cst_18 : f32 to vector<16x128xf32>
      %49 = arith.subf %48, %40 : vector<16x128xf32>
      %50 = arith.mulf %49, %47 : vector<16x128xf32>
      %51 = arith.mulf %40, %17 : vector<16x128xf32>
      %52 = arith.addf %50, %51 : vector<16x128xf32>
      %c8_i32_19 = arith.constant 8 : i32
      %53 = arith.muli %arg1, %c8_i32_19 : i32
      %54 = arith.addi %53, %arg11 : i32
      %55 = vector.broadcast %54 : i32 to vector<16x1xi32>
      %56 = arith.cmpi slt, %55, %10 : vector<16x1xi32>
      %57 = vector.shape_cast %56 : vector<16x1xi1> to vector<16x1xi1>
      %58 = vector.broadcast %57 : vector<16x1xi1> to vector<16x128xi1>
      %59 = arith.select %58, %52, %17 : vector<16x128xi1>, vector<16x128xf32>
      %c0_20 = arith.constant 0 : index
      %c0_21 = arith.constant 0 : index
      %60 = vector.load %arg10[%c0_20, %c0_21] : memref<16x128xf32, #tpu.memory_space<vmem>>, vector<16x128xf32>
      tpu.vector_store %arg10[%c0_20, %c0_21], %59 {strides = array<i32>} : memref<16x128xf32, #tpu.memory_space<vmem>>, vector<16x128xf32>,
    }
    %c0_i32_8 = arith.constant 0 : i32
    %14 = arith.cmpi eq, %arg1, %c0_i32_8 : i32
    %15 = arith.extui %14 : i1 to i32
    %c0_i32_9 = arith.constant 0 : i32
    %16 = arith.cmpi ne, %15, %c0_i32_9 : i32
    scf.if %16 {
      %c0_10 = arith.constant 0 : index
      %c0_11 = arith.constant 0 : index
      %17 = vector.load %arg10[%c0_10, %c0_11] : memref<16x128xf32, #tpu.memory_space<vmem>>, vector<16x128xf32>
      %18 = arith.truncf %17 : vector<16x128xf32> to vector<16x128xbf16>
      %c0_12 = arith.constant 0 : index
      %c0_13 = arith.constant 0 : index
      %19 = vector.load %arg7[%c0_12, %c0_13] : memref<128x128xbf16, #tpu.memory_space<vmem>>, vector<128x128xbf16>
      %cst = arith.constant dense<0.000000e+00> : vector<16x128xf32>
      %20 = tpu.matmul %18, %19, %cst {dimension_numbers = #tpu.dot_dimension_numbers<[1], [0], [0], [1], [0, 0, 1, 1], [], []>} : vector<16x128xbf16>, vector<128x128xbf16>, vector<16x128xf32> -> vector<16x128xf32>
      %c0_14 = arith.constant 0 : index
      %c0_15 = arith.constant 0 : index
      %21 = vector.load %arg8[%c0_14, %c0_15] : memref<1x128xf32, #tpu.memory_space<vmem>>, vector<1x128xf32>
      %22 = vector.broadcast %21 : vector<1x128xf32> to vector<16x128xf32>
      %23 = arith.addf %20, %22 : vector<16x128xf32>
      %c0_16 = arith.constant 0 : index
      %c0_17 = arith.constant 0 : index
      %24 = vector.load %arg9[%c0_16, %c0_17] : memref<16x128xf32, #tpu.memory_space<vmem>>, vector<16x128xf32>
      tpu.vector_store %arg9[%c0_16, %c0_17], %23 {strides = array<i32>} : memref<16x128xf32, #tpu.memory_space<vmem>>, vector<16x128xf32>,
    } else {
    }
    return
  }
  func.func @transform_0(%arg0: i32, %arg1: i32, %arg2: memref<16xi32, #tpu.memory_space<smem>>) -> (i32, i32, i32) {
    %c0_i32 = arith.constant 0 : i32
    %c0_i32_0 = arith.constant 0 : i32
    return %arg1, %arg0, %c0_i32 : i32, i32, i32
  }
  func.func @transform_1(%arg0: i32, %arg1: i32, %arg2: memref<16xi32, #tpu.memory_space<smem>>) -> (i32, i32) {
    %c0_i32 = arith.constant 0 : i32
    %c0_i32_0 = arith.constant 0 : i32
    return %arg0, %c0_i32 : i32, i32
  }
  func.func @transform_2(%arg0: i32, %arg1: i32, %arg2: memref<16xi32, #tpu.memory_space<smem>>) -> (i32, i32) {
    %c0_i32 = arith.constant 0 : i32
    %c0_i32_0 = arith.constant 0 : i32
    %c0_i32_1 = arith.constant 0 : i32
    return %c0_i32, %c0_i32_0 : i32, i32
  }
  func.func @transform_3(%arg0: i32, %arg1: i32, %arg2: memref<16xi32, #tpu.memory_space<smem>>) -> (i32, i32) {
    %c0_i32 = arith.constant 0 : i32
    %c0_i32_0 = arith.constant 0 : i32
    %c0_i32_1 = arith.constant 0 : i32
    return %c0_i32, %c0_i32_0 : i32, i32
  }
  func.func @transform_4(%arg0: i32, %arg1: i32, %arg2: memref<16xi32, #tpu.memory_space<smem>>) -> (i32, i32) {
    %c0_i32 = arith.constant 0 : i32
    %c0_i32_0 = arith.constant 0 : i32
    %c0_i32_1 = arith.constant 0 : i32
    return %c0_i32, %c0_i32_0 : i32, i32
  }
  func.func @transform_5(%arg0: i32, %arg1: i32, %arg2: memref<16xi32, #tpu.memory_space<smem>>) -> (i32, i32) {
    %c0_i32 = arith.constant 0 : i32
    %c0_i32_0 = arith.constant 0 : i32
    %c0_i32_1 = arith.constant 0 : i32
    return %c0_i32, %c0_i32_0 : i32, i32
  }
  func.func @transform_6(%arg0: i32, %arg1: i32, %arg2: memref<16xi32, #tpu.memory_space<smem>>) -> (i32, i32) {
    %c0_i32 = arith.constant 0 : i32
    %c0_i32_0 = arith.constant 0 : i32
    return %arg0, %c0_i32 : i32, i32
  }
}

</mosaic_0001>

<llo_original>
// kernel: gru_classifier_forward.1
$region0: #{gru_classifier_forward.1}
  #allocation0 [shape = 'u32[]', space=smem, size = 0x4, offset = 0x4, fixed_abs, tag = 'smem constant byte address 0x4 - core index']
  #allocation1 [shape = 'u32[72,128]{1,0:T(1,128)}', space=vmem, size = 0x9000, scoped, tag = 'internal scratch']
  #allocation2 [shape = 'f32[16,128]{1,0:T(8,128)}', space=vmem, size = 0x2000, scoped, tag = 'scratch operand']
  #allocation3 [shape = 's32[1]{0}', space=sflag, size = 0x4, scoped, tag = 'scoped memory for gru_classifier_forward.1']
  #allocation4 [shape = 'u8[512]{0}', space=smem, size = 0x200, scoped, tag = 'prefetched SMEM operand 0']
  %s0 = inlined_call_operand.vmem [shape: s32[16], index: 0, kind: input, shape index: {}]
  %s1 = inlined_call_operand.vmem [shape: bf16[8,16,384], index: 1, kind: input, shape index: {}]
  %s2 = inlined_call_operand.vmem [shape: s32[16,1], index: 2, kind: input, shape index: {}]
  %s3 = inlined_call_operand.vmem [shape: bf16[128,384], index: 3, kind: input, shape index: {}]
  %s4 = inlined_call_operand.vmem [shape: f32[1,128], index: 4, kind: input, shape index: {}]
  %s5 = inlined_call_operand.vmem [shape: bf16[128,128], index: 5, kind: input, shape index: {}]
  %s6 = inlined_call_operand.vmem [shape: f32[1,128], index: 6, kind: input, shape index: {}]
  %s7 = inlined_call_operand.vmem [shape: f32[16,128], index: 7, kind: output, shape index: {}]
  %s8 = sld [smem:[#allocation0]]
  $region49: #{gru_classifier_forward.1} parent=0
    _
  %s10 = ssub.s32 1, %s8
  %s11 = scalar_select 0, %s10, %s8
  %s13 = sshll.u32 %s0, 4
  %s14 = int_to_ptr.vmem [resolvable:$true] %s13
  %16 = dma.vmem_to_smem %s14, 16, [#allocation4], [#allocation3]
  %18 = dma.done [#allocation3], 16
  %19 = sfence
  // Predicated region
  $region2: #{gru_classifier_forward.1} parent=0 // pred_check
    _
  $region3: #{gru_classifier_forward.1} parent=0 // pred_check_branch
    %21 = sbr.rel (0) target = $region5
  $region4: #{gru_classifier_forward.1} parent=0 // pred_region
    _
  $region5: #{gru_classifier_forward.1} parent=0 // pred_fallthru
    _
  // Predicated region
  $region6: #{gru_classifier_forward.1} parent=0 // pred_check
    _
  $region7: #{gru_classifier_forward.1} parent=0 // pred_check_branch
    %23 = sbr.rel (0) target = $region9
  $region8: #{gru_classifier_forward.1} parent=0 // pred_region
    _
  $region9: #{gru_classifier_forward.1} parent=0 // pred_fallthru
    _
  // Predicated region
  $region10: #{gru_classifier_forward.1} parent=0 // pred_check
    _
  $region11: #{gru_classifier_forward.1} parent=0 // pred_check_branch
    %25 = sbr.rel (0) target = $region13
  $region12: #{gru_classifier_forward.1} parent=0 // pred_region
    _
  $region13: #{gru_classifier_forward.1} parent=0 // pred_fallthru
    _
  // Predicated region
  $region14: #{gru_classifier_forward.1} parent=0 // pred_check
    _
  $region15: #{gru_classifier_forward.1} parent=0 // pred_check_branch
    %27 = sbr.rel (0) target = $region17
  $region16: #{gru_classifier_forward.1} parent=0 // pred_region
    _
  $region17: #{gru_classifier_forward.1} parent=0 // pred_fallthru
    _
  // Predicated region
  $region18: #{gru_classifier_forward.1} parent=0 // pred_check
    _
  $region19: #{gru_classifier_forward.1} parent=0 // pred_check_branch
    %29 = sbr.rel (0) target = $region21
  $region20: #{gru_classifier_forward.1} parent=0 // pred_region
    _
  $region21: #{gru_classifier_forward.1} parent=0 // pred_fallthru
    _
  // Predicated region
  $region22: #{gru_classifier_forward.1} parent=0 // pred_check
    _
  $region23: #{gru_classifier_forward.1} parent=0 // pred_check_branch
    %31 = sbr.rel (0) target = $region25
  $region24: #{gru_classifier_forward.1} parent=0 // pred_region
    _
  $region25: #{gru_classifier_forward.1} parent=0 // pred_fallthru
    _
  %p32 = scmp.eq.s32.totalorder 0, 0
  // Predicated region
  $region26: #{gru_classifier_forward.1} parent=0 // pred_check
    %p33 = pneg %p32
  $region27: #{gru_classifier_forward.1} parent=0 // pred_check_branch
    %35 = sbr.rel (%p33) target = $region29
  $region28: #{gru_classifier_forward.1} parent=0 // pred_region
    %36 = vst [vmem:[#allocation2] sm:$0xff] 0.0
    %37 = vst [vmem:[#allocation2 + $0x8] sm:$0xff] 0.0
  $region29: #{gru_classifier_forward.1} parent=0 // pred_fallthru
    _
  %s38 = smul.u32 0, 16
  %s39 = sld [smem:[#allocation4 + %s38]]
  %s40 = smul.u32 0, 8
  %s41 = ssub.s32 %s39, %s40
  %p42 = scmp.gt.s32.totalorder %s41, 0
  %s43 = scalar_select %p42, %s41, 0
  %p44 = scmp.lt.s32.totalorder %s43, 8
  %s45 = scalar_select %p44, %s43, 8
  %v46 = vld [vmem:[%s2] sm:$0xff]
  %v47 = vld [vmem:[%s2 + $0x8] sm:$0xff]
  %v48 = vld [vmem:[%s4] sm:$0x1]
  // While loop
  $region30: #{gru_classifier_forward.1} parent=0 // loop_pre_header
    _
  $region31: #{gru_classifier_forward.1} parent=0 // loop_header
    %s50 = sphi 0, %s52
    %p51 = scmp.ge.s32.totalorder %s50, %s45
  $region32: #{gru_classifier_forward.1} parent=0 // loop_header_branch
    %54 = sbr.rel (%p51) target = $region36
  $region33: #{gru_classifier_forward.1} parent=0 // loop_body
    %v55 = vld [vmem:[#allocation2] sm:$0xff]
    %v56 = vld [vmem:[#allocation2 + $0x8] sm:$0xff]
    %s57 = smul.u32 %s50, 6
    %s58 = smul.addr %s57, 4
    %s59 = scalar_lea.vmem %s1, %s58
    %v60 = vld [vmem:[%s59] sm:$0xff]
    %v61 = vld [vmem:[%s59 + $0x8] sm:$0xf]
    %v62 = vld [vmem:[%s59 + $0xc] sm:$0xff]
    %v63 = vld [vmem:[%s59 + $0x14] sm:$0xf]
    %v64 = vunpack.c.l.bf16 %v60
    %v65 = vunpack.c.h.bf16 %v60
    %v66 = vunpack.c.l.bf16 %v61
    %v67 = vunpack.c.l.bf16 %v62
    %v68 = vunpack.c.h.bf16 %v62
    %v69 = vunpack.c.l.bf16 %v63
    %v70 = vpack.c.bf16 %v56, %v55
    %v71 = vld [vmem:[%s3] sm:$0xff]
    %v72 = vld [vmem:[%s3 + $0x8] sm:$0xf]
    %v73 = vld [vmem:[%s3 + $0xc] sm:$0xff]
    %v74 = vld [vmem:[%s3 + $0x14] sm:$0xf]
    %v75 = vld [vmem:[%s3 + $0x18] sm:$0xff]
    %v76 = vld [vmem:[%s3 + $0x20] sm:$0xf]
    %v77 = vld [vmem:[%s3 + $0x24] sm:$0xff]
    %v78 = vld [vmem:[%s3 + $0x2c] sm:$0xf]
    %v79 = vld [vmem:[%s3 + $0x30] sm:$0xff]
    %v80 = vld [vmem:[%s3 + $0x38] sm:$0xf]
    %v81 = vld [vmem:[%s3 + $0x3c] sm:$0xff]
    %v82 = vld [vmem:[%s3 + $0x44] sm:$0xf]
    %v83 = vld [vmem:[%s3 + $0x48] sm:$0xff]
    %v84 = vld [vmem:[%s3 + $0x50] sm:$0xf]
    %v85 = vld [vmem:[%s3 + $0x54] sm:$0xff]
    %v86 = vld [vmem:[%s3 + $0x5c] sm:$0xf]
    %v87 = vld [vmem:[%s3 + $0x60] sm:$0xff]
    %v88 = vld [vmem:[%s3 + $0x68] sm:$0xf]
    %v89 = vld [vmem:[%s3 + $0x6c] sm:$0xff]
    %v90 = vld [vmem:[%s3 + $0x74] sm:$0xf]
    %v91 = vld [vmem:[%s3 + $0x78] sm:$0xff]
    %v92 = vld [vmem:[%s3 + $0x80] sm:$0xf]
    %v93 = vld [vmem:[%s3 + $0x84] sm:$0xff]
    %v94 = vld [vmem:[%s3 + $0x8c] sm:$0xf]
    %v95 = vld [vmem:[%s3 + $0x90] sm:$0xff]
    %v96 = vld [vmem:[%s3 + $0x98] sm:$0xf]
    %v97 = vld [vmem:[%s3 + $0x9c] sm:$0xff]
    %v98 = vld [vmem:[%s3 + $0xa4] sm:$0xf]
    %v99 = vld [vmem:[%s3 + $0xa8] sm:$0xff]
    %v100 = vld [vmem:[%s3 + $0xb0] sm:$0xf]
    %v101 = vld [vmem:[%s3 + $0xb4] sm:$0xff]
    %v102 = vld [vmem:[%s3 + $0xbc] sm:$0xf]
    %v135 = vunpack.c.l.b16 %v71
    %v136 = vunpack.c.h.b16 %v71
    %v137 = vunpack.c.l.b16 %v72
    %v138 = vunpack.c.l.b16 %v73
    %v139 = vunpack.c.h.b16 %v73
    %v140 = vunpack.c.l.b16 %v74
    %v141 = vunpack.c.l.b16 %v75
    %v142 = vunpack.c.h.b16 %v75
    %v143 = vunpack.c.l.b16 %v76
    %v144 = vunpack.c.l.b16 %v77
    %v145 = vunpack.c.h.b16 %v77
    %v146 = vunpack.c.l.b16 %v78
    %v147 = vunpack.c.l.b16 %v79
    %v148 = vunpack.c.h.b16 %v79
    %v149 = vunpack.c.l.b16 %v80
    %v150 = vunpack.c.l.b16 %v81
    %v151 = vunpack.c.h.b16 %v81
    %v152 = vunpack.c.l.b16 %v82
    %v153 = vunpack.c.l.b16 %v83
    %v154 = vunpack.c.h.b16 %v83
    %v155 = vunpack.c.l.b16 %v84
    %v156 = vunpack.c.l.b16 %v85
    %v157 = vunpack.c.h.b16 %v85
    %v158 = vunpack.c.l.b16 %v86
    %v159 = vunpack.c.l.b16 %v87
    %v160 = vunpack.c.h.b16 %v87
    %v161 = vunpack.c.l.b16 %v88
    %v162 = vunpack.c.l.b16 %v89
    %v163 = vunpack.c.h.b16 %v89
    %v164 = vunpack.c.l.b16 %v90
    %v165 = vunpack.c.l.b16 %v91
    %v166 = vunpack.c.h.b16 %v91
    %v167 = vunpack.c.l.b16 %v92
    %v168 = vunpack.c.l.b16 %v93
    %v169 = vunpack.c.h.b16 %v93
    %v170 = vunpack.c.l.b16 %v94
    %v171 = vunpack.c.l.b16 %v95
    %v172 = vunpack.c.h.b16 %v95
    %v173 = vunpack.c.l.b16 %v96
    %v174 = vunpack.c.l.b16 %v97
    %v175 = vunpack.c.h.b16 %v97
    %v176 = vunpack.c.l.b16 %v98
    %v177 = vunpack.c.l.b16 %v99
    %v178 = vunpack.c.h.b16 %v99
    %v179 = vunpack.c.l.b16 %v100
    %v180 = vunpack.c.l.b16 %v101
    %v181 = vunpack.c.h.b16 %v101
    %v182 = vunpack.c.l.b16 %v102
    %v183 = vpack.c.b16 %v138, %v135
    %v184 = vpack.c.b16 %v139, %v136
    %v185 = vpack.c.b16 %v140, %v137
    %v186 = vpack.c.b16 %v144, %v141
    %v187 = vpack.c.b16 %v145, %v142
    %v188 = vpack.c.b16 %v146, %v143
    %v189 = vpack.c.b16 %v150, %v147
    %v190 = vpack.c.b16 %v151, %v148
    %v191 = vpack.c.b16 %v152, %v149
    %v192 = vpack.c.b16 %v156, %v153
    %v193 = vpack.c.b16 %v157, %v154
    %v194 = vpack.c.b16 %v158, %v155
    %v195 = vpack.c.b16 %v162, %v159
    %v196 = vpack.c.b16 %v163, %v160
    %v197 = vpack.c.b16 %v164, %v161
    %v198 = vpack.c.b16 %v168, %v165
    %v199 = vpack.c.b16 %v169, %v166
    %v200 = vpack.c.b16 %v170, %v167
    %v201 = vpack.c.b16 %v174, %v171
    %v202 = vpack.c.b16 %v175, %v172
    %v203 = vpack.c.b16 %v176, %v173
    %v204 = vpack.c.b16 %v180, %v177
    %v205 = vpack.c.b16 %v181, %v178
    %v206 = vpack.c.b16 %v182, %v179
    %231 = vmatpush.bf16.msra.mxu0 %v204
    %232 = vmatpush.bf16.msra.mxu0 %v201
    %233 = vmatpush.bf16.msra.mxu0 %v198
    %234 = vmatpush.bf16.msra.mxu0 %v195
    %235 = vmatpush.bf16.msra.mxu0 %v192
    %236 = vmatpush.bf16.msra.mxu0 %v189
    %237 = vmatpush.bf16.msra.mxu0 %v186
    %238 = vmatpush.bf16.msra.mxu0 %v183
    %239 = vmatmul.bf16.gmra.mxu0 %v70
    %v240 = vpop.f32.mrf.mxu0
    %v241 = vadd.f32 0.0, %v240
    %v242 = vpop.f32.mrf.mxu0
    %v243 = vadd.f32 0.0, %v242
    %244 = vdwg.mxu0
    %245 = vmatpush.bf16.msra.mxu0 %v205
    %246 = vmatpush.bf16.msra.mxu0 %v202
    %247 = vmatpush.bf16.msra.mxu0 %v199
    %248 = vmatpush.bf16.msra.mxu0 %v196
    %249 = vmatpush.bf16.msra.mxu0 %v193
    %250 = vmatpush.bf16.msra.mxu0 %v190
    %251 = vmatpush.bf16.msra.mxu0 %v187
    %252 = vmatpush.bf16.msra.mxu0 %v184
    %253 = vmatmul.bf16.gmra.mxu0 %v70
    %v254 = vpop.f32.mrf.mxu0
    %v255 = vadd.f32 0.0, %v254
    %v256 = vpop.f32.mrf.mxu0
    %v257 = vadd.f32 0.0, %v256
    %258 = vdwg.mxu0
    %259 = vmatpush.bf16.msra.mxu0 %v206
    %260 = vmatpush.bf16.msra.mxu0 %v203
    %261 = vmatpush.bf16.msra.mxu0 %v200
    %262 = vmatpush.bf16.msra.mxu0 %v197
    %263 = vmatpush.bf16.msra.mxu0 %v194
    %264 = vmatpush.bf16.msra.mxu0 %v191
    %265 = vmatpush.bf16.msra.mxu0 %v188
    %266 = vmatpush.bf16.msra.mxu0 %v185
    %267 = vmatmul.bf16.gmra.mxu0 %v70
    %v268 = vpop.f32.mrf.mxu0
    %v269 = vadd.f32 0.0, %v268
    %v270 = vpop.f32.mrf.mxu0
    %v271 = vadd.f32 0.0, %v270
    %272 = vdwg.mxu0
    %v273 = vadd.f32 %v64, %v241
    %v274 = vadd.f32 %v67, %v243
    %v275 = vxor.u32 %v273, 2147483648
    %v276 = vxor.u32 %v274, 2147483648
    %v277 = vmul.f32 %v275, 1.442695
    %v278 = vpow.pop %v277
    %v279 = vmul.f32 %v276, 1.442695
    %v280 = vpow.pop %v279
    %v281 = vadd.f32 %v278, 1.0
    %v282 = vadd.f32 %v280, 1.0
    %v283 = vrcp.pop %v281
    %v284 = vmul.f32 %v281, %v283
    %v285 = vsub.f32 1.0, %v284
    %v286 = vmul.f32 %v283, %v285
    %v287 = vadd.f32 %v283, %v286
    %vm288 = vweird.f32 %v281
    %vm289 = vweird.f32 %v283
    %vm290 = vmor %vm288, %vm289
    %v291 = vsel %vm290, %v283, %v287
    %v292 = vand.u32 2147483647, %v281
    %vm293 = vcmp.eq.f32.partialorder %v292, 8.507059e+37
    %v294 = vand.u32 %v281, 2147483648
    %v295 = vor.u32 1.1754944e-38, %v294
    %v296 = vsel %vm293, %v295, %v291
    %v297 = vmul.f32 1.0, %v296
    %v298 = vrcp.pop %v282
    %v299 = vmul.f32 %v282, %v298
    %v300 = vsub.f32 1.0, %v299
    %v301 = vmul.f32 %v298, %v300
    %v302 = vadd.f32 %v298, %v301
    %vm303 = vweird.f32 %v282
    %vm304 = vweird.f32 %v298
    %vm305 = vmor %vm303, %vm304
    %v306 = vsel %vm305, %v298, %v302
    %v307 = vand.u32 2147483647, %v282
    %vm308 = vcmp.eq.f32.partialorder %v307, 8.507059e+37
    %v309 = vand.u32 %v282, 2147483648
    %v310 = vor.u32 1.1754944e-38, %v309
    %v311 = vsel %vm308, %v310, %v306
    %v312 = vmul.f32 1.0, %v311
    %v313 = vadd.f32 %v65, %v255
    %v314 = vadd.f32 %v68, %v257
    %v315 = vxor.u32 %v313, 2147483648
    %v316 = vxor.u32 %v314, 2147483648
    %v317 = vmul.f32 %v315, 1.442695
    %v318 = vpow.pop %v317
    %v319 = vmul.f32 %v316, 1.442695
    %v320 = vpow.pop %v319
    %v321 = vadd.f32 %v318, 1.0
    %v322 = vadd.f32 %v320, 1.0
    %v323 = vrcp.pop %v321
    %v324 = vmul.f32 %v321, %v323
    %v325 = vsub.f32 1.0, %v324
    %v326 = vmul.f32 %v323, %v325
    %v327 = vadd.f32 %v323, %v326
    %vm328 = vweird.f32 %v321
    %vm329 = vweird.f32 %v323
    %vm330 = vmor %vm328, %vm329
    %v331 = vsel %vm330, %v323, %v327
    %v332 = vand.u32 2147483647, %v321
    %vm333 = vcmp.eq.f32.partialorder %v332, 8.507059e+37
    %v334 = vand.u32 %v321, 2147483648
    %v335 = vor.u32 1.1754944e-38, %v334
    %v336 = vsel %vm333, %v335, %v331
    %v337 = vmul.f32 1.0, %v336
    %v338 = vrcp.pop %v322
    %v339 = vmul.f32 %v322, %v338
    %v340 = vsub.f32 1.0, %v339
    %v341 = vmul.f32 %v338, %v340
    %v342 = vadd.f32 %v338, %v341
    %vm343 = vweird.f32 %v322
    %vm344 = vweird.f32 %v338
    %vm345 = vmor %vm343, %vm344
    %v346 = vsel %vm345, %v338, %v342
    %v347 = vand.u32 2147483647, %v322
    %vm348 = vcmp.eq.f32.partialorder %v347, 8.507059e+37
    %v349 = vand.u32 %v322, 2147483648
    %v350 = vor.u32 1.1754944e-38, %v349
    %v351 = vsel %vm348, %v350, %v346
    %v352 = vmul.f32 1.0, %v351
    %v354 = vperm.slane %v48, 0
    %v356 = vadd.f32 %v269, %v354
    %v357 = vadd.f32 %v271, %v354
    %v358 = vmul.f32 %v297, %v356
    %v359 = vmul.f32 %v312, %v357
    %v360 = vadd.f32 %v66, %v358
    %v361 = vadd.f32 %v69, %v359
    %v362 = vtanh.pop %v360
    %v363 = vtanh.pop %v361
    %v364 = vsub.f32 1.0, %v337
    %v365 = vsub.f32 1.0, %v352
    %v366 = vmul.f32 %v364, %v362
    %v367 = vmul.f32 %v365, %v363
    %v368 = vmul.f32 %v337, %v55
    %v369 = vmul.f32 %v352, %v56
    %v370 = vadd.f32 %v366, %v368
    %v371 = vadd.f32 %v367, %v369
    %s372 = sadd.s32 %s40, %s50
    %v373 = vstv %s372
    %vm374 = vcmp.lt.s32.totalorder %v373, %v46
    %vm375 = vcmp.lt.s32.totalorder %v373, %v47
    %v376 = vsel %vm374, 1, 0
    %v377 = vsel %vm375, 1, 0
    %378 = vset.pattern.permute.xlu0 0
    %379 = vperm.xlu0 %378, %v376
    %v380 = vpop.permute.xlu0 %379
    %381 = vset.pattern.permute.xlu0 0
    %382 = vperm.xlu0 %381, %v377
    %v383 = vpop.permute.xlu0 %382
    %vm384 = vcmp.eq.s32.totalorder %v380, 1
    %vm385 = vcmp.eq.s32.totalorder %v383, 1
    %v386 = vsel %vm384, %v370, %v55
    %v387 = vsel %vm385, %v371, %v56
    %388 = vst [vmem:[#allocation2] sm:$0xff] %v386
    %389 = vst [vmem:[#allocation2 + $0x8] sm:$0xff] %v387
  $region34: #{gru_classifier_forward.1} parent=0 // loop_footer
    %s52 = sadd.s32 %s50, 1
  $region35: #{gru_classifier_forward.1} parent=0 // loop_footer_branch
    %49 = sbr.rel target = $region31
  $region36: #{gru_classifier_forward.1} parent=0 // loop_exit
    _
  // Predicated region
  $region37: #{gru_classifier_forward.1} parent=0 // pred_check
    %p390 = pneg %p32
  $region38: #{gru_classifier_forward.1} parent=0 // pred_check_branch
    %392 = sbr.rel (%p390) target = $region40
  $region39: #{gru_classifier_forward.1} parent=0 // pred_region
    %v393 = vld [vmem:[#allocation2] sm:$0xff]
    %v394 = vld [vmem:[#allocation2 + $0x8] sm:$0xff]
    %v395 = vpack.c.bf16 %v394, %v393
    %v396 = vld [vmem:[%s5] sm:$0xf]
    %v397 = vld [vmem:[%s5 + $0x4] sm:$0xf]
    %v398 = vld [vmem:[%s5 + $0x8] sm:$0xf]
    %v399 = vld [vmem:[%s5 + $0xc] sm:$0xf]
    %v400 = vld [vmem:[%s5 + $0x10] sm:$0xf]
    %v401 = vld [vmem:[%s5 + $0x14] sm:$0xf]
    %v402 = vld [vmem:[%s5 + $0x18] sm:$0xf]
    %v403 = vld [vmem:[%s5 + $0x1c] sm:$0xf]
    %v404 = vld [vmem:[%s5 + $0x20] sm:$0xf]
    %v405 = vld [vmem:[%s5 + $0x24] sm:$0xf]
    %v406 = vld [vmem:[%s5 + $0x28] sm:$0xf]
    %v407 = vld [vmem:[%s5 + $0x2c] sm:$0xf]
    %v408 = vld [vmem:[%s5 + $0x30] sm:$0xf]
    %v409 = vld [vmem:[%s5 + $0x34] sm:$0xf]
    %v410 = vld [vmem:[%s5 + $0x38] sm:$0xf]
    %v411 = vld [vmem:[%s5 + $0x3c] sm:$0xf]
    %v412 = vld [vmem:[%s6] sm:$0x1]
    %v414 = vperm.slane %v412, 0
    %v432 = vunpack.c.l.b16 %v396
    %v433 = vunpack.c.l.b16 %v397
    %v434 = vunpack.c.l.b16 %v398
    %v435 = vunpack.c.l.b16 %v399
    %v436 = vunpack.c.l.b16 %v400
    %v437 = vunpack.c.l.b16 %v401
    %v438 = vunpack.c.l.b16 %v402
    %v439 = vunpack.c.l.b16 %v403
    %v440 = vunpack.c.l.b16 %v404
    %v441 = vunpack.c.l.b16 %v405
    %v442 = vunpack.c.l.b16 %v406
    %v443 = vunpack.c.l.b16 %v407
    %v444 = vunpack.c.l.b16 %v408
    %v445 = vunpack.c.l.b16 %v409
    %v446 = vunpack.c.l.b16 %v410
    %v447 = vunpack.c.l.b16 %v411
    %v448 = vpack.c.b16 %v433, %v432
    %v449 = vpack.c.b16 %v435, %v434
    %v450 = vpack.c.b16 %v437, %v436
    %v451 = vpack.c.b16 %v439, %v438
    %v452 = vpack.c.b16 %v441, %v440
    %v453 = vpack.c.b16 %v443, %v442
    %v454 = vpack.c.b16 %v445, %v444
    %v455 = vpack.c.b16 %v447, %v446
    %464 = vmatpush.bf16.msra.mxu0 %v455
    %465 = vmatpush.bf16.msra.mxu0 %v454
    %466 = vmatpush.bf16.msra.mxu0 %v453
    %467 = vmatpush.bf16.msra.mxu0 %v452
    %468 = vmatpush.bf16.msra.mxu0 %v451
    %469 = vmatpush.bf16.msra.mxu0 %v450
    %470 = vmatpush.bf16.msra.mxu0 %v449
    %471 = vmatpush.bf16.msra.mxu0 %v448
    %472 = vmatmul.bf16.gmra.mxu0 %v395
    %v473 = vpop.f32.mrf.mxu0
    %v474 = vadd.f32 %v414, %v473
    %v475 = vpop.f32.mrf.mxu0
    %v476 = vadd.f32 %v414, %v475
    %477 = vdwg.mxu0
    %478 = vst [vmem:[%s7] sm:$0xff] %v474
    %479 = vst [vmem:[%s7 + $0x8] sm:$0xff] %v476
  $region40: #{gru_classifier_forward.1} parent=0 // pred_fallthru
    _
  // Predicated region
  $region41: #{gru_classifier_forward.1} parent=0 // pred_check
    _
  $region42: #{gru_classifier_forward.1} parent=0 // pred_check_branch
    %481 = sbr.rel (0) target = $region44
  $region43: #{gru_classifier_forward.1} parent=0 // pred_region
    _
  $region44: #{gru_classifier_forward.1} parent=0 // pred_fallthru
    _
  // Predicated region
  $region45: #{gru_classifier_forward.1} parent=0 // pred_check
    _
  $region46: #{gru_classifier_forward.1} parent=0 // pred_check_branch
    %483 = sbr.rel (0) target = $region48
  $region47: #{gru_classifier_forward.1} parent=0 // pred_region
    _
  $region48: #{gru_classifier_forward.1} parent=0 // pred_fallthru
    _

</llo_original>
